<compile_context>
chip_gen: v7x
topology: tpu7x:2x2x1
jax: 0.10.0
libtpu: 0.0.40
codegen_flags: <defaults>
</compile_context>

<pallas_src>
import functools

import jax
import jax.numpy as jnp
from jax.experimental import pallas as pl
from jax.experimental.pallas import tpu as pltpu

_INV_SQRT2 = 0.7071067811865476

# ~2 MiB per input block: with double-buffered input + output this is
# ~8-9 MiB of VMEM, inside every generation's default scoped limit
# (v5e 16 MiB, v6e/v7x 32 MiB) while large enough to amortize the
# ~0.35 us/step grid overhead.  Measured streaming kernels already sit at
# ~85% of HBM roofline at this size, so we do not chase larger tiles.
_TARGET_BLOCK_BYTES = 2 * 1024 * 1024


def _bn_gelu_kernel(x_ref, scale_ref, bias_ref, o_ref):
    # x_ref: (tile_rows, tile_cols) in the INPUT dtype.
    # scale_ref / bias_ref: (tile_rows, 1) f32, already folded with 1/sqrt(2).
    x = x_ref[...].astype(jnp.float32)
    z = x * scale_ref[...] + bias_ref[...]            # z = y / sqrt(2)
    gelu = (z * _INV_SQRT2) * (1.0 + jax.lax.erf(z))  # == 0.5*y*(1+erf(y/sqrt2))
    o_ref[...] = gelu.astype(o_ref.dtype)


def _largest_divisor(extent, unit, cap):
    """Largest divisor of `extent` that is a multiple of `unit` and <= cap.

    Assumes extent % unit == 0; always returns at least `unit`.
    """
    cap = min(extent, max(unit, cap))
    best = unit
    for d in range(unit, cap + 1, unit):
        if extent % d == 0:
            best = d
    return best


@functools.partial(jax.jit, static_argnames=("eps",))
def bn_gelu(x_nchw, gamma, beta, running_mean, running_var, eps=1e-5):
    """BatchNorm2d (eval mode) + exact GELU. x_nchw: (N, C, H, W)."""
    N, C, H, W = x_nchw.shape
    rows = N * C
    cols = H * W
    in_dtype = x_nchw.dtype
    itemsize = jnp.dtype(in_dtype).itemsize

    # --- Fold BN into per-channel affine, then fold in GELU's 1/sqrt(2). ---
    inv_std = jax.lax.rsqrt(running_var.astype(jnp.float32) + eps)
    scale_c = gamma.astype(jnp.float32) * inv_std
    bias_c = beta.astype(jnp.float32) - running_mean.astype(jnp.float32) * scale_c
    scale2_c = scale_c * _INV_SQRT2
    bias2_c = bias_c * _INV_SQRT2
    # Row index = n*C + c  =>  tile per-channel params N times.
    scale_rows = jnp.tile(scale2_c, N).reshape(rows, 1)
    bias_rows = jnp.tile(bias2_c, N).reshape(rows, 1)

    # Free reshape of contiguous NCHW: (N, C, H, W) -> (N*C, H*W). No dtype cast.
    x_rows = x_nchw.reshape(rows, cols)

    # --- Tile selection (bounded so no block can blow the VMEM budget). ---
    # Lane axis: capped so that even the minimum 8-row block fits the target.
    col_cap = max(128, _TARGET_BLOCK_BYTES // (itemsize * 8))
    if cols % 128 == 0:
        tile_cols = _largest_divisor(cols, 128, col_cap)
    else:
        tile_cols = cols  # full-extent block is always legal (ragged lane dim)
    # Row axis: fill the remaining budget, multiple of 8 (or full extent).
    row_cap = max(8, _TARGET_BLOCK_BYTES // (itemsize * tile_cols))
    if rows % 8 == 0:
        tile_rows = _largest_divisor(rows, 8, row_cap)
    else:
        tile_rows = rows

    grid_rows = rows // tile_rows
    grid_cols = cols // tile_cols

    # v7x has 2 TensorCores sharding "parallel" grid axes: guarantee >= 2 grid
    # steps when the shape allows (prefer splitting rows -> contiguous DMAs).
    if grid_rows * grid_cols < 2:
        if rows % 8 == 0 and rows // 8 >= 2:
            tile_rows = _largest_divisor(rows, 8, rows // 2)
            grid_rows = rows // tile_rows
        elif cols % 128 == 0 and cols // 128 >= 2:
            tile_cols = _largest_divisor(cols, 128, cols // 2)
            grid_cols = cols // tile_cols

    grid = (grid_rows, grid_cols)  # rows OUTER: keeps scale/bias copies elided
                                   # across the inner cols loop. Do not flip.

    # VMEM budget: double-buffered input + output blocks (+ tiny scale/bias).
    block_bytes = tile_rows * tile_cols * itemsize
    needed = 4 * block_bytes + 4 * tile_rows * 4 + (1 << 20)
    vmem_limit = min(64 << 20, max(16 << 20, needed))

    cost = pl.CostEstimate(
        flops=6 * rows * cols,
        transcendentals=rows * cols,
        bytes_accessed=2 * rows * cols * itemsize + 2 * rows * 4,
    )

    out_rows = pl.pallas_call(
        _bn_gelu_kernel,
        out_shape=jax.ShapeDtypeStruct((rows, cols), in_dtype),
        grid_spec=pltpu.PrefetchScalarGridSpec(
            num_scalar_prefetch=0,
            grid=grid,
            in_specs=[
                pl.BlockSpec((tile_rows, tile_cols), lambda i, j: (i, j)),
                pl.BlockSpec((tile_rows, 1), lambda i, j: (i, 0)),
                pl.BlockSpec((tile_rows, 1), lambda i, j: (i, 0)),
            ],
            out_specs=pl.BlockSpec((tile_rows, tile_cols), lambda i, j: (i, j)),
        ),
        compiler_params=pltpu.CompilerParams(
            dimension_semantics=("parallel", "parallel"),
            vmem_limit_bytes=vmem_limit,
        ),
        cost_estimate=cost,
    )(x_rows, scale_rows, bias_rows)

    # Free reshape back to NCHW; dtype already matches the input.
    return out_rows.reshape(N, C, H, W)


if __name__ == "__main__":
    key = jax.random.PRNGKey(0)
    k_x, k_g, k_b, k_m, k_v = jax.random.split(key, 5)

    N, C, H, W = 2, 4, 16, 16
    x = jax.random.normal(k_x, (N, C, H, W), dtype=jnp.float32)

    # Deterministic synthetic BN parameters / running stats.
    gamma = 1.0 + 0.1 * jax.random.normal(k_g, (C,), dtype=jnp.float32)
    beta = 0.1 * jax.random.normal(k_b, (C,), dtype=jnp.float32)
    running_mean = 0.1 * jax.random.normal(k_m, (C,), dtype=jnp.float32)
    running_var = 1.0 + 0.1 * jax.random.uniform(k_v, (C,), dtype=jnp.float32)

    out = bn_gelu(x, gamma, beta, running_mean, running_var)
    jax.block_until_ready(out)

    # Reference check in plain JAX (eval-mode BN + exact erf GELU).
    inv_std = jax.lax.rsqrt(running_var + 1e-5)
    y_ref = (x - running_mean[None, :, None, None]) * inv_std[None, :, None, None]
    y_ref = y_ref * gamma[None, :, None, None] + beta[None, :, None, None]
    ref = 0.5 * y_ref * (1.0 + jax.lax.erf(y_ref * _INV_SQRT2))
    assert out.shape == (N, C, H, W)
    assert out.dtype == x.dtype
    assert jnp.allclose(out, ref, atol=1e-5, rtol=1e-5)

    print("KERNEL_OK")
</pallas_src>

<mosaic_0001>
module attributes {stable_mosaic.version = 11 : i64} {
  func.func @_bn_gelu_kernel(%arg0: i32, %arg1: i32, %arg2: memref<8x128xf32, #tpu.memory_space<vmem>>, %arg3: memref<8x1xf32, #tpu.memory_space<vmem>>, %arg4: memref<8x1xf32, #tpu.memory_space<vmem>>, %arg5: memref<8x128xf32, #tpu.memory_space<vmem>>) attributes {dimension_semantics = [#tpu.dimension_semantics<parallel>, #tpu.dimension_semantics<parallel>], iteration_bounds = array<i64: 1, 2>, scalar_prefetch = 0 : i64, scratch_operands = 0 : i64, tpu.core_type = #tpu.core_type<tc>, window_params = [{transform_indices = @transform_0, window_bounds = array<i64: 8, 128>}, {transform_indices = @transform_1, window_bounds = array<i64: 8, 1>}, {transform_indices = @transform_2, window_bounds = array<i64: 8, 1>}, {transform_indices = @transform_3, window_bounds = array<i64: 8, 128>}]} {
    %c0 = arith.constant 0 : index
    %c0_0 = arith.constant 0 : index
    %0 = vector.load %arg2[%c0, %c0_0] : memref<8x128xf32, #tpu.memory_space<vmem>>, vector<8x128xf32>
    %c0_1 = arith.constant 0 : index
    %c0_2 = arith.constant 0 : index
    %1 = vector.load %arg3[%c0_1, %c0_2] : memref<8x1xf32, #tpu.memory_space<vmem>>, vector<8x1xf32>
    %2 = vector.broadcast %1 : vector<8x1xf32> to vector<8x128xf32>
    %3 = arith.mulf %0, %2 : vector<8x128xf32>
    %c0_3 = arith.constant 0 : index
    %c0_4 = arith.constant 0 : index
    %4 = vector.load %arg4[%c0_3, %c0_4] : memref<8x1xf32, #tpu.memory_space<vmem>>, vector<8x1xf32>
    %5 = vector.broadcast %4 : vector<8x1xf32> to vector<8x128xf32>
    %6 = arith.addf %3, %5 : vector<8x128xf32>
    %cst = arith.constant 0.707106769 : f32
    %7 = vector.broadcast %cst : f32 to vector<8x128xf32>
    %8 = arith.mulf %6, %7 : vector<8x128xf32>
    %9 = math.erf %6 : vector<8x128xf32>
    %cst_5 = arith.constant 1.000000e+00 : f32
    %10 = vector.broadcast %cst_5 : f32 to vector<8x128xf32>
    %11 = arith.addf %10, %9 : vector<8x128xf32>
    %12 = arith.mulf %8, %11 : vector<8x128xf32>
    %c0_6 = arith.constant 0 : index
    %c0_7 = arith.constant 0 : index
    %13 = vector.load %arg5[%c0_6, %c0_7] : memref<8x128xf32, #tpu.memory_space<vmem>>, vector<8x128xf32>
    tpu.vector_store %arg5[%c0_6, %c0_7], %12 {strides = array<i32>} : memref<8x128xf32, #tpu.memory_space<vmem>>, vector<8x128xf32>,
    return
  }
  func.func @transform_0(%arg0: i32, %arg1: i32) -> (i32, i32) {
    %c0_i32 = arith.constant 0 : i32
    return %arg0, %arg1 : i32, i32
  }
  func.func @transform_1(%arg0: i32, %arg1: i32) -> (i32, i32) {
    %c0_i32 = arith.constant 0 : i32
    %c0_i32_0 = arith.constant 0 : i32
    return %arg0, %c0_i32 : i32, i32
  }
  func.func @transform_2(%arg0: i32, %arg1: i32) -> (i32, i32) {
    %c0_i32 = arith.constant 0 : i32
    %c0_i32_0 = arith.constant 0 : i32
    return %arg0, %c0_i32 : i32, i32
  }
  func.func @transform_3(%arg0: i32, %arg1: i32) -> (i32, i32) {
    %c0_i32 = arith.constant 0 : i32
    return %arg0, %arg1 : i32, i32
  }
}

</mosaic_0001>

<llo_original>
// kernel: tile.0
$region0: #{tile.0}
  %s0 = inlined_call_operand.vmem [shape: f32[2,4], index: 0, kind: input, shape index: {}]
  %s1 = inlined_call_operand.vmem [shape: f32[8,1], index: 1, kind: output, shape index: {}]
  $region1: #{tile.0} parent=0
    #allocation0 [shape = 'u8[4096]{0}', space=vmem, size = 0x1000, scoped, tag = 'scoped mem for input reshape']
    %s3 = sshllo.u32 0, 2
    %v4 = vld [vmem:[%s0] sm:%s3]
    %5 = vst [vmem:[#allocation0] sm:%s3] %v4
    %v6 = vld [vmem:[#allocation0] sm:$0x3]
    %vm7 = vcmask 7168
    %8 = vst.msk [vmem:[%s1] ss:$4 sm:$0x3] %vm7, %v6
    %v9 = vld [vmem:[#allocation0] sm:$0x3]
    %10 = vrot.lane.b32.xlu0 %v9, 127
    %v11 = vpop.permute.xlu0 %10
    %vm12 = vcmask 7168
    %s13 = scalar_lea.vmem %s1, 1
    %14 = vst.msk [vmem:[%s13] ss:$4 sm:$0x3] %vm12, %v11
    %v15 = vld [vmem:[#allocation0] sm:$0x3]
    %16 = vrot.lane.b32.xlu0 %v15, 126
    %v17 = vpop.permute.xlu0 %16
    %vm18 = vcmask 7168
    %s19 = scalar_lea.vmem %s1, 2
    %20 = vst.msk [vmem:[%s19] ss:$4 sm:$0x3] %vm18, %v17
    %v21 = vld [vmem:[#allocation0] sm:$0x3]
    %22 = vrot.lane.b32.xlu0 %v21, 125
    %v23 = vpop.permute.xlu0 %22
    %vm24 = vcmask 7168
    %s25 = scalar_lea.vmem %s1, 3
    %26 = vst.msk [vmem:[%s25] ss:$4 sm:$0x3] %vm24, %v23

// kernel: tile.18
$region0: #{tile.18}
  #allocation0 [shape = 's32[1]{0}', space=sflag, size = 0x4, scoped, tag = 'scoped memory for tile.18']
  %s0 = inlined_call_operand.vmem [shape: f32[4], index: 0, kind: input, shape index: {}]
  %s1 = inlined_call_operand.vmem [shape: f32[2,4], index: 1, kind: output, shape index: {}]
  // Predicated region
  $region2: #{tile.18} parent=0 // pred_check
    _
  $region3: #{tile.18} parent=0 // pred_check_branch
    %3 = sbr.rel (0) target = $region5
  $region4: #{tile.18} parent=0 // pred_region
    _
  $region5: #{tile.18} parent=0 // pred_fallthru
    _
  %v4 = vld [vmem:[%s0] ss:$0 sm:$0xff]
  %5 = vst [vmem:[%s1] sm:$0x3] %v4

// kernel: bn_gelu.1
$region0: #{bn_gelu.1}
  #allocation0 [shape = 'u32[]', space=smem, size = 0x4, offset = 0x4, fixed_abs, tag = 'smem constant byte address 0x4 - core index']
  #allocation1 [shape = 'u32[144,128]{1,0:T(1,128)}', space=vmem, size = 0x12000, scoped, tag = 'internal scratch']
  %s0 = inlined_call_operand.vmem [shape: f32[8,256], index: 0, kind: input, shape index: {}]
  %s1 = inlined_call_operand.vmem [shape: f32[8,1], index: 1, kind: input, shape index: {}]
  %s2 = inlined_call_operand.vmem [shape: f32[8,1], index: 2, kind: input, shape index: {}]
  %s3 = inlined_call_operand.vmem [shape: f32[8,256], index: 3, kind: output, shape index: {}]
  %s4 = sld [smem:[#allocation0]]
  $region45: #{bn_gelu.1} parent=0
    _
  %s6 = ssub.s32 1, %s4
  %s7 = scalar_select 0, %s6, %s4
  loop: start=0, step=1, limit=4
  $region2: #{bn_gelu.1} parent=0 // loop_pre_header
    _
  $region3: #{bn_gelu.1} parent=0 // loop_header
    %s9 = sphi 0, %s13
    %p10 = scmp.ge.s32.totalorder %s9, 4
    %s16 = sphi 0, %s28
    %s17 = sphi 0, %s24
    %s18 = sphi 0, %s16
    %s19 = sphi 0, %s17
    %s20 = sphi 0, %s18
    %s21 = sphi 0, %s19
    %s33 = sphi 0, %s35
    %s36 = sphi 0, %s33
    %s37 = sphi 0, %s36
    %s53 = sphi 0, %s37
    %s59 = sphi 0, %s61
    %s62 = sphi 0, %s59
    %s63 = sphi 0, %s62
    %s79 = sphi 0, %s63
    %s85 = sphi 0, %s87
    %s88 = sphi 0, %s85
    %s89 = sphi 0, %s88
    %s105 = sphi 0, %s89
    %s113 = sphi 0, %s115
    %s116 = sphi 0, %s113
    %s117 = sphi 0, %s116
    %s133 = sphi 0, %s117
  $region4: #{bn_gelu.1} parent=0 // loop_header_branch
    %12 = sbr.rel (%p10) target = $region8
  $region5: #{bn_gelu.1} parent=0 // loop_body
    %s14 = ssub.s32 %s9, 1
    %s15 = ssub.s32 %s9, 2
    %s22 = sadd.s32 1, %s17
    %p23 = scmp.ge.s32.totalorder %s22, 2
    %s24 = scalar_select %p23, 0, %s22
    %s25 = sadd.s32 1, %s16
    %s26 = scalar_select %p23, %s25, %s16
    %p27 = scmp.ge.s32.totalorder %s26, 1
    %s28 = scalar_select %p27, 0, %s26
    %s29 = ssub.s32 %s16, %s28
    %s30 = ssub.s32 %s17, %s24
    %s31 = sor.u32 %s29, %s30
    %p32 = scmp.eq.s32.totalorder %s31, 0
    %s34 = sadd.s32 %s33, 1
    %s35 = scalar_select %p32, %s33, %s34
    %p38 = pneg %p32
    %p39 = scmp.eq.s32.totalorder %s9, 1
    %p40 = por %p38, %p39
    %p41 = scmp.ne.s32.totalorder %s33, %s36
    %p42 = scmp.eq.s32.totalorder %s9, 0
    %p43 = por %p41, %p42
    %p44 = scmp.ne.s32.totalorder %s33, %s36
    %p45 = scmp.eq.s32.totalorder %s14, 1
    %p46 = por %p44, %p45
    %p47 = scmp.ne.s32.totalorder %s36, %s37
    %p48 = scmp.eq.s32.totalorder %s14, 0
    %p49 = por %p47, %p48
    %p50 = scmp.ne.s32.totalorder %s36, %s37
    %p51 = scmp.eq.s32.totalorder %s15, 1
    %p52 = por %p50, %p51
    %p54 = scmp.ne.s32.totalorder %s37, %s53
    %p55 = scmp.eq.s32.totalorder %s15, 0
    %p56 = por %p54, %p55
    %s57 = ssub.s32 %s16, %s28
    %p58 = scmp.eq.s32.totalorder %s57, 0
    %s60 = sadd.s32 %s59, 1
    %s61 = scalar_select %p58, %s59, %s60
    %p64 = pneg %p58
    %p65 = scmp.eq.s32.totalorder %s9, 1
    %p66 = por %p64, %p65
    %p67 = scmp.ne.s32.totalorder %s59, %s62
    %p68 = scmp.eq.s32.totalorder %s9, 0
    %p69 = por %p67, %p68
    %p70 = scmp.ne.s32.totalorder %s59, %s62
    %p71 = scmp.eq.s32.totalorder %s14, 1
    %p72 = por %p70, %p71
    %p73 = scmp.ne.s32.totalorder %s62, %s63
    %p74 = scmp.eq.s32.totalorder %s14, 0
    %p75 = por %p73, %p74
    %p76 = scmp.ne.s32.totalorder %s62, %s63
    %p77 = scmp.eq.s32.totalorder %s15, 1
    %p78 = por %p76, %p77
    %p80 = scmp.ne.s32.totalorder %s63, %s79
    %p81 = scmp.eq.s32.totalorder %s15, 0
    %p82 = por %p80, %p81
    %s83 = ssub.s32 %s16, %s28
    %p84 = scmp.eq.s32.totalorder %s83, 0
    %s86 = sadd.s32 %s85, 1
    %s87 = scalar_select %p84, %s85, %s86
    %p90 = pneg %p84
    %p91 = scmp.eq.s32.totalorder %s9, 1
    %p92 = por %p90, %p91
    %p93 = scmp.ne.s32.totalorder %s85, %s88
    %p94 = scmp.eq.s32.totalorder %s9, 0
    %p95 = por %p93, %p94
    %p96 = scmp.ne.s32.totalorder %s85, %s88
    %p97 = scmp.eq.s32.totalorder %s14, 1
    %p98 = por %p96, %p97
    %p99 = scmp.ne.s32.totalorder %s88, %s89
    %p100 = scmp.eq.s32.totalorder %s14, 0
    %p101 = por %p99, %p100
    %p102 = scmp.ne.s32.totalorder %s88, %s89
    %p103 = scmp.eq.s32.totalorder %s15, 1
    %p104 = por %p102, %p103
    %p106 = scmp.ne.s32.totalorder %s89, %s105
    %p107 = scmp.eq.s32.totalorder %s15, 0
    %p108 = por %p106, %p107
    %s109 = ssub.s32 %s16, %s28
    %s110 = ssub.s32 %s17, %s24
    %s111 = sor.u32 %s109, %s110
    %p112 = scmp.eq.s32.totalorder %s111, 0
    %s114 = sadd.s32 %s113, 1
    %s115 = scalar_select %p112, %s113, %s114
    %p118 = pneg %p112
    %p119 = scmp.eq.s32.totalorder %s9, 1
    %p120 = por %p118, %p119
    %p121 = scmp.ne.s32.totalorder %s113, %s116
    %p122 = scmp.eq.s32.totalorder %s9, 0
    %p123 = por %p121, %p122
    %p124 = scmp.ne.s32.totalorder %s113, %s116
    %p125 = scmp.eq.s32.totalorder %s14, 1
    %p126 = por %p124, %p125
    %p127 = scmp.ne.s32.totalorder %s116, %s117
    %p128 = scmp.eq.s32.totalorder %s14, 0
    %p129 = por %p127, %p128
    %p130 = scmp.ne.s32.totalorder %s116, %s117
    %p131 = scmp.eq.s32.totalorder %s15, 1
    %p132 = por %p130, %p131
    %p134 = scmp.ne.s32.totalorder %s117, %s133
    %p135 = scmp.eq.s32.totalorder %s15, 0
    %p136 = por %p134, %p135
    %p137 = scmp.le.s32.totalorder 1, %s9
    %p138 = scmp.lt.s32.totalorder %s9, 3
    %p139 = pnand %p137, %p138
    %p140 = pneg %p139
    // Predicated region
    $region9: #{bn_gelu.1} parent=5 // pred_check
      _
    $region10: #{bn_gelu.1} parent=5 // pred_check_branch
      %142 = sbr.rel (%p139) target = $region12
    $region11: #{bn_gelu.1} parent=5 // pred_region
      %s143 = ssub.s32 %s9, 1
      // Predicated region
      $region13: #{bn_gelu.1} parent=11 // pred_check
        %p144 = pneg %p75
      $region14: #{bn_gelu.1} parent=11 // pred_check_branch
        %146 = sbr.rel (%p144) target = $region16
      $region15: #{bn_gelu.1} parent=11 // pred_region
        %p147 = scmp.lt.s32.totalorder %s18, 0
        %s148 = scalar_select %p147, %s18, 0
        %s149 = smul.addr %s148, 8
        %s150 = scalar_lea.vmem %s1, %s149
      $region16: #{bn_gelu.1} parent=11 // pred_fallthru
        _
      // Predicated region
      $region17: #{bn_gelu.1} parent=11 // pred_check
        %p151 = pneg %p101
      $region18: #{bn_gelu.1} parent=11 // pred_check_branch
        %153 = sbr.rel (%p151) target = $region20
      $region19: #{bn_gelu.1} parent=11 // pred_region
        %p154 = scmp.lt.s32.totalorder %s18, 0
        %s155 = scalar_select %p154, %s18, 0
        %s156 = smul.addr %s155, 8
        %s157 = scalar_lea.vmem %s2, %s156
      $region20: #{bn_gelu.1} parent=11 // pred_fallthru
        _
    $region12: #{bn_gelu.1} parent=5 // pred_fallthru
      _
    %p158 = scmp.lt.s32.totalorder %s9, 2
    // Predicated region
    $region21: #{bn_gelu.1} parent=5 // pred_check
      %p159 = pneg %p158
    $region22: #{bn_gelu.1} parent=5 // pred_check_branch
      %161 = sbr.rel (%p159) target = $region24
    $region23: #{bn_gelu.1} parent=5 // pred_region
      // Predicated region
      $region25: #{bn_gelu.1} parent=23 // pred_check
        %p162 = pneg %p43
      $region26: #{bn_gelu.1} parent=23 // pred_check_branch
        %164 = sbr.rel (%p162) target = $region28
      $region27: #{bn_gelu.1} parent=23 // pred_region
        %p165 = scmp.lt.s32.totalorder %s16, 0
        %s166 = scalar_select %p165, %s16, 0
        %p167 = scmp.lt.s32.totalorder %s17, 1
        %s168 = scalar_select %p167, %s17, 1
        %s169 = smul.addr %s166, 2
        %s170 = sadd.s32 %s168, %s169
        %s171 = smul.addr %s170, 8
        %s172 = scalar_lea.vmem %s0, %s171
      $region28: #{bn_gelu.1} parent=23 // pred_fallthru
        _
    $region24: #{bn_gelu.1} parent=5 // pred_fallthru
      _
    %p173 = scmp.le.s32.totalorder 1, %s9
    %p174 = scmp.lt.s32.totalorder %s9, 3
    %p175 = pnand %p173, %p174
    %p176 = pneg %p175
    // Predicated region
    $region29: #{bn_gelu.1} parent=5 // pred_check
      _
    $region30: #{bn_gelu.1} parent=5 // pred_check_branch
      %178 = sbr.rel (%p175) target = $region32
    $region31: #{bn_gelu.1} parent=5 // pred_region
      %s179 = ssub.s32 %s9, 1
      %p180 = scmp.lt.s32.totalorder %s18, 0
      %s181 = scalar_select %p180, %s18, 0
      %p182 = scmp.lt.s32.totalorder %s19, 1
      %s183 = scalar_select %p182, %s19, 1
      %s184 = smul.addr %s181, 2
      %s185 = sadd.s32 %s183, %s184
      %s186 = smul.addr %s185, 8
      %s187 = scalar_lea.vmem %s0, %s186
      %p188 = pneg %p49
      %p189 = pneg %p46
      %p190 = scmp.lt.s32.totalorder %s18, 0
      %s191 = scalar_select %p190, %s18, 0
      %s192 = smul.addr %s191, 8
      %s193 = scalar_lea.vmem %s1, %s192
      %p194 = pneg %p75
      %p195 = pneg %p72
      %p196 = scmp.lt.s32.totalorder %s18, 0
      %s197 = scalar_select %p196, %s18, 0
      %s198 = smul.addr %s197, 8
      %s199 = scalar_lea.vmem %s2, %s198
      %p200 = pneg %p101
      %p201 = pneg %p98
      %p202 = pneg %p129
      %p203 = pneg %p126
      %p204 = scmp.lt.s32.totalorder %s18, 0
      %s205 = scalar_select %p204, %s18, 0
      %p206 = scmp.lt.s32.totalorder %s19, 1
      %s207 = scalar_select %p206, %s19, 1
      %s208 = smul.addr %s205, 2
      %s209 = sadd.s32 %s207, %s208
      %s210 = smul.addr %s209, 8
      %s211 = scalar_lea.vmem %s3, %s210
      %p212 = scmp.lt.s32.totalorder %s18, 0
      %s213 = scalar_select %p212, %s18, 0
      %p214 = scmp.lt.s32.totalorder %s19, 1
      %s215 = scalar_select %p214, %s19, 1
      %s216 = smul.addr %s213, 2
      %s217 = sadd.s32 %s215, %s216
      %s218 = smul.addr %s217, 8
      %s219 = scalar_lea.vmem %s0, %s218
      %p220 = scmp.lt.s32.totalorder %s18, 0
      %s221 = scalar_select %p220, %s18, 0
      %s222 = smul.addr %s221, 8
      %s223 = scalar_lea.vmem %s1, %s222
      %p224 = scmp.lt.s32.totalorder %s18, 0
      %s225 = scalar_select %p224, %s18, 0
      %s226 = smul.addr %s225, 8
      %s227 = scalar_lea.vmem %s2, %s226
      %p228 = scmp.lt.s32.totalorder %s18, 0
      %s229 = scalar_select %p228, %s18, 0
      %p230 = scmp.lt.s32.totalorder %s19, 1
      %s231 = scalar_select %p230, %s19, 1
      %s232 = smul.addr %s229, 2
      %s233 = sadd.s32 %s231, %s232
      %s234 = smul.addr %s233, 8
      %s235 = scalar_lea.vmem %s3, %s234
      %v236 = vld [vmem:[%s219] sm:$0xff]
      %v237 = vld [vmem:[%s223] sm:$0xff]
      %239 = vset.pattern.permute.xlu0 0
      %240 = vperm.xlu0 %239, %v237
      %v241 = vpop.permute.xlu0 %240
      %v243 = vmul.f32 %v236, %v241
      %v244 = vld [vmem:[%s227] sm:$0xff]
      %246 = vset.pattern.permute.xlu0 0
      %247 = vperm.xlu0 %246, %v244
      %v248 = vpop.permute.xlu0 %247
      %v250 = vadd.f32 %v243, %v248
      %v251 = vmul.f32 %v250, 0.70710677
      %v252 = verf.f32.pop %v250
      %v253 = vadd.f32 %v252, 1.0
      %v254 = vmul.f32 %v251, %v253
      %255 = vst [vmem:[%s235] sm:$0xff] %v254
      %p256 = scmp.lt.s32.totalorder %s18, 0
      %s257 = scalar_select %p256, %s18, 0
      %p258 = scmp.lt.s32.totalorder %s19, 1
      %s259 = scalar_select %p258, %s19, 1
      %s260 = smul.addr %s257, 2
      %s261 = sadd.s32 %s259, %s260
      %s262 = smul.addr %s261, 8
      %s263 = scalar_lea.vmem %s3, %s262
      // Predicated region
      $region33: #{bn_gelu.1} parent=31 // pred_check
        %p264 = pneg %p126
      $region34: #{bn_gelu.1} parent=31 // pred_check_branch
        %266 = sbr.rel (%p264) target = $region36
      $region35: #{bn_gelu.1} parent=31 // pred_region
        _
      $region36: #{bn_gelu.1} parent=31 // pred_fallthru
        _
    $region32: #{bn_gelu.1} parent=5 // pred_fallthru
      _
    %p267 = scmp.le.s32.totalorder 2, %s9
    // Predicated region
    $region37: #{bn_gelu.1} parent=5 // pred_check
      %p268 = pneg %p267
    $region38: #{bn_gelu.1} parent=5 // pred_check_branch
      %270 = sbr.rel (%p268) target = $region40
    $region39: #{bn_gelu.1} parent=5 // pred_region
      %s271 = ssub.s32 %s9, 2
      // Predicated region
      $region41: #{bn_gelu.1} parent=39 // pred_check
        %p272 = pneg %p132
      $region42: #{bn_gelu.1} parent=39 // pred_check_branch
        %274 = sbr.rel (%p272) target = $region44
      $region43: #{bn_gelu.1} parent=39 // pred_region
        %p275 = scmp.lt.s32.totalorder %s20, 0
        %s276 = scalar_select %p275, %s20, 0
        %p277 = scmp.lt.s32.totalorder %s21, 1
        %s278 = scalar_select %p277, %s21, 1
        %s279 = smul.addr %s276, 2
        %s280 = sadd.s32 %s278, %s279
        %s281 = smul.addr %s280, 8
        %s282 = scalar_lea.vmem %s3, %s281
      $region44: #{bn_gelu.1} parent=39 // pred_fallthru
        _
    $region40: #{bn_gelu.1} parent=5 // pred_fallthru
      _
  $region6: #{bn_gelu.1} parent=0 // loop_footer
    %s13 = sadd.s32 1, %s9
  $region7: #{bn_gelu.1} parent=0 // loop_footer_branch
    %8 = sbr.rel target = $region3
  $region8: #{bn_gelu.1} parent=0 // loop_exit
    _

</llo_original>
